<compile_context>
chip_gen: v7x
topology: tpu7x:2x2x1
jax: 0.10.0
libtpu: 0.0.40
codegen_flags: <defaults>
</compile_context>

<pallas_src>
import jax
import jax.numpy as jnp
from jax.experimental import pallas as pl
from jax.experimental.pallas import tpu as pltpu


# ----------------------------------------------------------------------------
# Pallas kernel: single-block identity copy through VMEM.
# The wrapper presents a lane-dense (rows, 128) slab, so the body is exactly
# one full-width vector load + store per vreg row — no grid, no masked stores.
# ----------------------------------------------------------------------------
def _copy_kernel(x_ref, o_ref):
    o_ref[...] = x_ref[...]


def pallas_identity_nchw(x: jax.Array) -> jax.Array:
    """Copies an NCHW tensor through VMEM with a single-block Pallas kernel."""
    n, c, h, w = x.shape
    total = n * c * h * w
    assert total % 128 == 0, "demo expects N*C*H*W to be a multiple of 128"
    rows = total // 128

    # Lane-dense presentation: last dim = 128 lanes (2*4*16*16 = 16 * 128).
    x2 = x.reshape(rows, 128)

    y2 = pl.pallas_call(
        _copy_kernel,
        out_shape=jax.ShapeDtypeStruct((rows, 128), x.dtype),
        # No grid: the whole array is one block resident in VMEM -> one DMA
        # pair instead of 8 per-(n,c) grid steps.
        in_specs=[pl.BlockSpec(memory_space=pltpu.MemorySpace.VMEM)],
        out_specs=pl.BlockSpec(memory_space=pltpu.MemorySpace.VMEM),
        # Identity: alias output onto the input buffer (halves HBM allocation;
        # XLA inserts a copy only if the operand buffer cannot be reused).
        input_output_aliases={0: 0},
    )(x2)

    return y2.reshape(n, c, h, w)


# jit-wrap so the reshape is a free bitcast and the alias stays internal to the
# computation (the caller's `x` is NOT donated and remains valid afterwards).
_pallas_identity_nchw = jax.jit(pallas_identity_nchw)


# ----------------------------------------------------------------------------
# JAX-side mirror of the PyTorch `Net` container.
# ----------------------------------------------------------------------------
class Net:
    """JAX mirror of the PyTorch `Net` container module.

    The original module only stores five sub-models and exposes an *empty*
    forward().  Sub-model parameter pytrees are held here as opaque handles
    (deterministically built placeholders) since their classes are undefined
    in the provided source.
    """

    def __init__(self, reference_unet, denoising_unet, face_locator,
                 imageproj, audioproj):
        self.reference_unet = reference_unet
        self.denoising_unet = denoising_unet
        self.face_locator = face_locator
        self.imageproj = imageproj
        self.audioproj = audioproj

    def forward(self):
        """Empty function to override abstract function of nn.Module.

        Faithful to the reference: performs no computation, returns None.
        """
        return None

    def get_modules(self):
        """Simple method mirroring the PyTorch accessor."""
        return {
            "reference_unet": self.reference_unet,
            "denoising_unet": self.denoising_unet,
            "face_locator": self.face_locator,
            "imageproj": self.imageproj,
            "audioproj": self.audioproj,
        }


if __name__ == "__main__":
    key = jax.random.PRNGKey(0)

    # Deterministic placeholder "parameters" for the five sub-modules (their
    # real architectures are external to the provided module source).
    keys = jax.random.split(key, 6)
    net = Net(
        reference_unet={"w": jax.random.normal(keys[0], (32, 32), jnp.float32)},
        denoising_unet={"w": jax.random.normal(keys[1], (32, 32), jnp.float32)},
        face_locator={"w": jax.random.normal(keys[2], (32, 32), jnp.float32)},
        imageproj={"w": jax.random.normal(keys[3], (32, 32), jnp.float32)},
        audioproj={"w": jax.random.normal(keys[4], (32, 32), jnp.float32)},
    )

    # Exercise the (empty) forward — must return None, matching PyTorch.
    assert net.forward() is None
    assert set(net.get_modules().keys()) == {
        "reference_unet", "denoising_unet", "face_locator",
        "imageproj", "audioproj",
    }

    # Run the Pallas identity kernel once on a small NCHW tensor and block.
    x = jax.random.normal(keys[5], (2, 4, 16, 16), jnp.float32)  # NCHW
    y = _pallas_identity_nchw(x)
    y = jax.block_until_ready(y)
    assert y.shape == x.shape and y.dtype == x.dtype
    assert bool(jnp.allclose(y, x))

    print("KERNEL_OK")
</pallas_src>

<mosaic_0001>
module attributes {stable_mosaic.version = 11 : i64} {
  func.func @_copy_kernel(%arg0: memref<16x128xf32, #tpu.memory_space<vmem>>, %arg1: memref<16x128xf32, #tpu.memory_space<vmem>>) attributes {dimension_semantics = [], scalar_prefetch = 0 : i64, scratch_operands = 0 : i64, tpu.core_type = #tpu.core_type<tc>} {
    %c0 = arith.constant 0 : index
    %c0_0 = arith.constant 0 : index
    %0 = vector.load %arg0[%c0, %c0_0] : memref<16x128xf32, #tpu.memory_space<vmem>>, vector<16x128xf32>
    %c0_1 = arith.constant 0 : index
    %c0_2 = arith.constant 0 : index
    %1 = vector.load %arg1[%c0_1, %c0_2] : memref<16x128xf32, #tpu.memory_space<vmem>>, vector<16x128xf32>
    tpu.vector_store %arg1[%c0_1, %c0_2], %0 {strides = array<i32>} : memref<16x128xf32, #tpu.memory_space<vmem>>, vector<16x128xf32>,
    return
  }
}

</mosaic_0001>

<llo_original>
// kernel: pallas_identity_nchw.1
$region0: #{pallas_identity_nchw.1}
  #allocation0 [shape = 'u32[]', space=smem, size = 0x4, offset = 0x4, fixed_abs, tag = 'smem constant byte address 0x4 - core index']
  #allocation1 [shape = 'u32[144,128]{1,0:T(1,128)}', space=vmem, size = 0x12000, scoped, tag = 'internal scratch']
  %s0 = inlined_call_operand.vmem [shape: f32[16,128], index: 0, kind: input, shape index: {}, may-alias: {0,1}]
  %s1 = inlined_call_operand.vmem [shape: f32[16,128], index: 1, kind: output, shape index: {}, may-alias: {0,1}]
  %s2 = sld [smem:[#allocation0]]
  $region14: #{pallas_identity_nchw.1} parent=0
    _
  %s4 = ssub.s32 1, %s2
  %s5 = scalar_select 0, %s4, %s2
  // Predicated region
  $region2: #{pallas_identity_nchw.1} parent=0 // pred_check
    _
  $region3: #{pallas_identity_nchw.1} parent=0 // pred_check_branch
    %7 = sbr.rel (0) target = $region5
  $region4: #{pallas_identity_nchw.1} parent=0 // pred_region
    _
  $region5: #{pallas_identity_nchw.1} parent=0 // pred_fallthru
    _
  %v8 = vld [vmem:[%s0] sm:$0xff]
  %v9 = vld [vmem:[%s0 + $0x8] sm:$0xff]
  %10 = vst [vmem:[%s1] sm:$0xff] %v8
  %11 = vst [vmem:[%s1 + $0x8] sm:$0xff] %v9
  // Predicated region
  $region6: #{pallas_identity_nchw.1} parent=0 // pred_check
    _
  $region7: #{pallas_identity_nchw.1} parent=0 // pred_check_branch
    %13 = sbr.rel (0) target = $region9
  $region8: #{pallas_identity_nchw.1} parent=0 // pred_region
    _
  $region9: #{pallas_identity_nchw.1} parent=0 // pred_fallthru
    _
  // Predicated region
  $region10: #{pallas_identity_nchw.1} parent=0 // pred_check
    _
  $region11: #{pallas_identity_nchw.1} parent=0 // pred_check_branch
    %15 = sbr.rel (0) target = $region13
  $region12: #{pallas_identity_nchw.1} parent=0 // pred_region
    _
  $region13: #{pallas_identity_nchw.1} parent=0 // pred_fallthru
    _

</llo_original>
